<compile_context>
chip_gen: v7x
topology: tpu7x:2x2x1
jax: 0.10.0
libtpu: 0.0.40
codegen_flags: <defaults>
</compile_context>

<pallas_src>
import functools

import jax
import jax.numpy as jnp
from jax.experimental import pallas as pl
from jax.experimental.pallas import tpu as pltpu


def _round_up(n: int, m: int) -> int:
    return ((n + m - 1) // m) * m


def _make_autoencoder_kernel(num_layers: int, input_size: int):
    """Kernel: num_layers encoder Linears (+relu) then ONE fused head matmul."""

    def kernel(*refs):
        # refs layout:
        #   [x, (w_i, b_i) * num_layers, w_head, b_head, out]
        x_ref = refs[0]
        idx = 1
        h = x_ref[...].astype(jnp.float32)
        for _ in range(num_layers):
            w = refs[idx][...]
            b = refs[idx + 1][...]
            idx += 2
            h = jnp.maximum(
                jnp.dot(h, w, preferred_element_type=jnp.float32) + b, 0.0
            )
            # Dropout is identity in eval; subsequent relu(relu(.)) is a no-op.

        w_head = refs[idx][...]       # (hidden, padded_out) = [W_dec.T | W_vol.T | 0-pad]
        b_head = refs[idx + 1][...]   # (1, padded_out)      = [b_dec   | b_vol   | 0-pad]
        out_ref = refs[idx + 2]

        y = jnp.dot(h, w_head, preferred_element_type=jnp.float32) + b_head
        # relu only on the decoder columns; volatility column (index input_size)
        # and zero-padded columns pass through unchanged.
        col = jax.lax.broadcasted_iota(jnp.int32, y.shape, 1)
        y = jnp.where(col < input_size, jnp.maximum(y, 0.0), y)

        out_ref[...] = y.astype(out_ref.dtype)

    return kernel


def prepare_params(params):
    """One-time layout prep (hoisted out of the hot path).

    params: dict with 'enc' (list of (W, b) in PyTorch (out,in)/(out,) layout),
            'dec' (W, b), 'vol' (W, b).
    Returns (enc_w, enc_b, head_w, head_b, input_size) with:
      enc_w[i]: (in, out) f32, enc_b[i]: (1, out) f32
      head_w:   (hidden, padded_out) f32 (decoder || volatility, zero-padded to 128n)
      head_b:   (1, padded_out) f32
    """
    enc_w = tuple(jnp.asarray(w, jnp.float32).T for (w, _) in params["enc"])
    enc_b = tuple(jnp.asarray(b, jnp.float32).reshape(1, -1) for (_, b) in params["enc"])

    w_dec, b_dec = params["dec"]
    w_vol, b_vol = params["vol"]
    w_dec = jnp.asarray(w_dec, jnp.float32)   # (input, hidden)
    w_vol = jnp.asarray(w_vol, jnp.float32)   # (1, hidden)
    b_dec = jnp.asarray(b_dec, jnp.float32)   # (input,)
    b_vol = jnp.asarray(b_vol, jnp.float32)   # (1,)

    input_size = w_dec.shape[0]
    head_out = input_size + 1
    padded_out = _round_up(head_out, 128)     # lane-dense output slab
    pad = padded_out - head_out

    head_w = jnp.concatenate([w_dec.T, w_vol.T], axis=1)          # (hidden, input+1)
    head_w = jnp.pad(head_w, ((0, 0), (0, pad)))                  # (hidden, padded_out)
    head_b = jnp.concatenate([b_dec, b_vol]).reshape(1, -1)       # (1, input+1)
    head_b = jnp.pad(head_b, ((0, 0), (0, pad)))                  # (1, padded_out)

    return enc_w, enc_b, head_w, head_b, input_size


@functools.partial(jax.jit, static_argnames=("input_size",))
def autoencoder_forward(x, enc_w, enc_b, head_w, head_b, *, input_size):
    """Runs the fused forward pass; returns (decoded, volatility)."""
    batch = x.shape[0]
    num_layers = len(enc_w)
    padded_out = head_w.shape[1]

    kernel_args = [x]
    for w, b in zip(enc_w, enc_b):
        kernel_args.append(w)
        kernel_args.append(b)
    kernel_args.append(head_w)
    kernel_args.append(head_b)

    kernel = _make_autoencoder_kernel(num_layers, input_size)

    # Small model: everything resident in VMEM, no grid needed -> full-array blocks.
    in_specs = [
        pl.BlockSpec(memory_space=pltpu.MemorySpace.VMEM) for _ in kernel_args
    ]
    out_specs = pl.BlockSpec(memory_space=pltpu.MemorySpace.VMEM)
    out_shape = jax.ShapeDtypeStruct((batch, padded_out), jnp.float32)

    y = pl.pallas_call(
        kernel,
        out_shape=out_shape,
        in_specs=in_specs,
        out_specs=out_specs,
    )(*kernel_args)

    decoded = y[:, :input_size]
    volatility = y[:, input_size:input_size + 1]
    return decoded, volatility


def init_params(key, input_size, hidden_size, num_layers):
    """Deterministic init mimicking nn.Linear's U(-1/sqrt(fan_in), 1/sqrt(fan_in)),
    kept in PyTorch (out, in)/(out,) layout."""

    def linear_init(k, fan_in, fan_out):
        kw, kb = jax.random.split(k)
        bound = 1.0 / (fan_in ** 0.5)
        w = jax.random.uniform(kw, (fan_out, fan_in), jnp.float32, -bound, bound)
        b = jax.random.uniform(kb, (fan_out,), jnp.float32, -bound, bound)
        return w, b

    keys = jax.random.split(key, num_layers + 2)
    enc = [linear_init(keys[0], input_size, hidden_size)]
    for i in range(1, num_layers):
        enc.append(linear_init(keys[i], hidden_size, hidden_size))
    dec = linear_init(keys[num_layers], hidden_size, input_size)
    vol = linear_init(keys[num_layers + 1], hidden_size, 1)
    return {"enc": enc, "dec": dec, "vol": vol}


def reference_forward(x, params):
    """Pure-JAX reference (PyTorch-layout params) for correctness checking."""
    h = x
    for (w, b) in params["enc"]:
        h = jnp.maximum(h @ w.T + b, 0.0)
    w_dec, b_dec = params["dec"]
    w_vol, b_vol = params["vol"]
    decoded = jnp.maximum(h @ w_dec.T + b_dec, 0.0)
    volatility = h @ w_vol.T + b_vol
    return decoded, volatility


if __name__ == "__main__":
    input_size = 16
    hidden_size = 32
    num_layers = 2
    batch = 8

    key = jax.random.PRNGKey(0)
    k_x, k_p = jax.random.split(key)
    x = jax.random.normal(k_x, (batch, input_size), dtype=jnp.float32)
    params = init_params(k_p, input_size, hidden_size, num_layers)

    # One-time layout prep (hoisted out of the per-call path).
    enc_w, enc_b, head_w, head_b, in_sz = prepare_params(params)

    decoded, volatility = autoencoder_forward(
        x, enc_w, enc_b, head_w, head_b, input_size=in_sz
    )
    jax.block_until_ready((decoded, volatility))

    ref_dec, ref_vol = reference_forward(x, params)
    assert decoded.shape == (batch, input_size)
    assert volatility.shape == (batch, 1)
    assert jnp.allclose(decoded, ref_dec, atol=1e-5, rtol=1e-5)
    assert jnp.allclose(volatility, ref_vol, atol=1e-5, rtol=1e-5)

    print("KERNEL_OK")
</pallas_src>

<mosaic_0001>
module attributes {stable_mosaic.version = 11 : i64} {
  func.func @kernel(%arg0: memref<8x16xf32, #tpu.memory_space<vmem>>, %arg1: memref<16x32xf32, #tpu.memory_space<vmem>>, %arg2: memref<1x32xf32, #tpu.memory_space<vmem>>, %arg3: memref<32x32xf32, #tpu.memory_space<vmem>>, %arg4: memref<1x32xf32, #tpu.memory_space<vmem>>, %arg5: memref<32x128xf32, #tpu.memory_space<vmem>>, %arg6: memref<1x128xf32, #tpu.memory_space<vmem>>, %arg7: memref<8x128xf32, #tpu.memory_space<vmem>>) attributes {dimension_semantics = [], scalar_prefetch = 0 : i64, scratch_operands = 0 : i64, tpu.core_type = #tpu.core_type<tc>} {
    %c0 = arith.constant 0 : index
    %c0_0 = arith.constant 0 : index
    %0 = vector.load %arg0[%c0, %c0_0] : memref<8x16xf32, #tpu.memory_space<vmem>>, vector<8x16xf32>
    %c0_1 = arith.constant 0 : index
    %c0_2 = arith.constant 0 : index
    %1 = vector.load %arg1[%c0_1, %c0_2] : memref<16x32xf32, #tpu.memory_space<vmem>>, vector<16x32xf32>
    %c0_3 = arith.constant 0 : index
    %c0_4 = arith.constant 0 : index
    %2 = vector.load %arg2[%c0_3, %c0_4] : memref<1x32xf32, #tpu.memory_space<vmem>>, vector<1x32xf32>
    %cst = arith.constant dense<0.000000e+00> : vector<8x32xf32>
    %3 = tpu.matmul %0, %1, %cst {dimension_numbers = #tpu.dot_dimension_numbers<[1], [0], [0], [1], [0, 0, 1, 1], [], []>} : vector<8x16xf32>, vector<16x32xf32>, vector<8x32xf32> -> vector<8x32xf32>
    %4 = vector.broadcast %2 : vector<1x32xf32> to vector<8x32xf32>
    %5 = arith.addf %3, %4 : vector<8x32xf32>
    %cst_5 = arith.constant 0.000000e+00 : f32
    %6 = vector.broadcast %cst_5 : f32 to vector<8x32xf32>
    %7 = arith.maximumf %5, %6 : vector<8x32xf32>
    %c0_6 = arith.constant 0 : index
    %c0_7 = arith.constant 0 : index
    %8 = vector.load %arg3[%c0_6, %c0_7] : memref<32x32xf32, #tpu.memory_space<vmem>>, vector<32x32xf32>
    %c0_8 = arith.constant 0 : index
    %c0_9 = arith.constant 0 : index
    %9 = vector.load %arg4[%c0_8, %c0_9] : memref<1x32xf32, #tpu.memory_space<vmem>>, vector<1x32xf32>
    %cst_10 = arith.constant dense<0.000000e+00> : vector<8x32xf32>
    %10 = tpu.matmul %7, %8, %cst_10 {dimension_numbers = #tpu.dot_dimension_numbers<[1], [0], [0], [1], [0, 0, 1, 1], [], []>} : vector<8x32xf32>, vector<32x32xf32>, vector<8x32xf32> -> vector<8x32xf32>
    %11 = vector.broadcast %9 : vector<1x32xf32> to vector<8x32xf32>
    %12 = arith.addf %10, %11 : vector<8x32xf32>
    %cst_11 = arith.constant 0.000000e+00 : f32
    %13 = vector.broadcast %cst_11 : f32 to vector<8x32xf32>
    %14 = arith.maximumf %12, %13 : vector<8x32xf32>
    %c0_12 = arith.constant 0 : index
    %c0_13 = arith.constant 0 : index
    %15 = vector.load %arg5[%c0_12, %c0_13] : memref<32x128xf32, #tpu.memory_space<vmem>>, vector<32x128xf32>
    %c0_14 = arith.constant 0 : index
    %c0_15 = arith.constant 0 : index
    %16 = vector.load %arg6[%c0_14, %c0_15] : memref<1x128xf32, #tpu.memory_space<vmem>>, vector<1x128xf32>
    %cst_16 = arith.constant dense<0.000000e+00> : vector<8x128xf32>
    %17 = tpu.matmul %14, %15, %cst_16 {dimension_numbers = #tpu.dot_dimension_numbers<[1], [0], [0], [1], [0, 0, 1, 1], [], []>} : vector<8x32xf32>, vector<32x128xf32>, vector<8x128xf32> -> vector<8x128xf32>
    %18 = vector.broadcast %16 : vector<1x128xf32> to vector<8x128xf32>
    %19 = arith.addf %17, %18 : vector<8x128xf32>
    %20 = tpu.iota {dimensions = array<i32: 1>} : vector<8x128xi32>
    %c16_i32 = arith.constant 16 : i32
    %21 = vector.broadcast %c16_i32 : i32 to vector<8x128xi32>
    %22 = arith.cmpi slt, %20, %21 : vector<8x128xi32>
    %cst_17 = arith.constant 0.000000e+00 : f32
    %23 = vector.broadcast %cst_17 : f32 to vector<8x128xf32>
    %24 = arith.maximumf %19, %23 : vector<8x128xf32>
    %25 = arith.select %22, %24, %19 : vector<8x128xi1>, vector<8x128xf32>
    %c0_18 = arith.constant 0 : index
    %c0_19 = arith.constant 0 : index
    %26 = vector.load %arg7[%c0_18, %c0_19] : memref<8x128xf32, #tpu.memory_space<vmem>>, vector<8x128xf32>
    tpu.vector_store %arg7[%c0_18, %c0_19], %25 {strides = array<i32>} : memref<8x128xf32, #tpu.memory_space<vmem>>, vector<8x128xf32>,
    return
  }
}

</mosaic_0001>

<llo_original>
// kernel: autoencoder_forward.1
$region0: #{autoencoder_forward.1}
  #allocation0 [shape = 'u32[]', space=smem, size = 0x4, offset = 0x4, fixed_abs, tag = 'smem constant byte address 0x4 - core index']
  #allocation1 [shape = 'u32[144,128]{1,0:T(1,128)}', space=vmem, size = 0x12000, scoped, tag = 'internal scratch']
  %s0 = inlined_call_operand.hbm [shape: f32[8,16], index: 0, kind: input, shape index: {}]
  %s1 = inlined_call_operand.hbm [shape: f32[16,32], index: 1, kind: input, shape index: {}]
  %s2 = inlined_call_operand.vmem [shape: f32[1,32], index: 2, kind: input, shape index: {}]
  %s3 = inlined_call_operand.hbm [shape: f32[32,32], index: 3, kind: input, shape index: {}]
  %s4 = inlined_call_operand.vmem [shape: f32[1,32], index: 4, kind: input, shape index: {}]
  %s5 = inlined_call_operand.hbm [shape: f32[32,128], index: 5, kind: input, shape index: {}]
  %s6 = inlined_call_operand.vmem [shape: f32[1,128], index: 6, kind: input, shape index: {}]
  %s7 = inlined_call_operand.vmem [shape: f32[8,128], index: 7, kind: output, shape index: {}]
  %s8 = sld [smem:[#allocation0]]
  $region54: #{autoencoder_forward.1} parent=0
    _
  %s10 = ssub.s32 1, %s8
  %s11 = scalar_select 0, %s10, %s8
  $region1: #{autoencoder_forward.1} parent=0
    #allocation2 [shape = 'u8[4096]{0}', space=vmem, size = 0x1000, scoped, tag = 'input window, operand 0, single buffered']
    #allocation3 [shape = 's32[1]{0}', space=sflag, size = 0x4, scoped, tag = 'scoped memory for autoencoder_forward.1']
    #allocation4 [shape = 'u8[8192]{0}', space=vmem, size = 0x2000, scoped, tag = 'input window, operand 1, single buffered']
    #allocation5 [shape = 's32[1]{0}', space=sflag, size = 0x4, scoped, tag = 'scoped memory for autoencoder_forward.1']
    #allocation6 [shape = 'u8[16384]{0}', space=vmem, size = 0x4000, scoped, tag = 'input window, operand 3, single buffered']
    #allocation7 [shape = 'u8[16384]{0}', space=vmem, size = 0x4000, scoped, tag = 'input window, operand 5, single buffered']
    #allocation8 [shape = 's32[1]{0}', space=sflag, size = 0x4, scoped, tag = 'scoped memory for autoencoder_forward.1']
    %12 = vsyncpa [#allocation3], 0
    %13 = vsyncpa [#allocation5], 0
    %14 = vsyncpa [#allocation8], 0
    // Predicated region
    $region2: #{autoencoder_forward.1} parent=1 // pred_check
      _
    $region3: #{autoencoder_forward.1} parent=1 // pred_check_branch
      %16 = sbr.rel (0) target = $region5
    $region4: #{autoencoder_forward.1} parent=1 // pred_region
      %s18 = ssub.s32 128, 128
      %19 = vsyncadd [#allocation3], %s18
      %s21 = sshll.u32 [#allocation2], 4
      %s22 = int_to_ptr.vmem [resolvable:$true] %s21
      %24 = dma.hbm_to_vmem [thread:$0]  %s0, 128, %s22, [#allocation3]
    $region5: #{autoencoder_forward.1} parent=1 // pred_fallthru
      _
    // Predicated region
    $region6: #{autoencoder_forward.1} parent=1 // pred_check
      _
    $region7: #{autoencoder_forward.1} parent=1 // pred_check_branch
      %26 = sbr.rel (0) target = $region9
    $region8: #{autoencoder_forward.1} parent=1 // pred_region
      %s28 = ssub.s32 256, 256
      %29 = vsyncadd [#allocation5], %s28
      %s30 = sshll.u32 [#allocation4], 4
      %s31 = int_to_ptr.vmem [resolvable:$true] %s30
      %36 = dma.hbm_to_vmem [thread:$0]  %s1, 256, %s31, [#allocation5], 128, 128, 8
    $region9: #{autoencoder_forward.1} parent=1 // pred_fallthru
      _
    // Predicated region
    $region10: #{autoencoder_forward.1} parent=1 // pred_check
      _
    $region11: #{autoencoder_forward.1} parent=1 // pred_check_branch
      %38 = sbr.rel (0) target = $region13
    $region12: #{autoencoder_forward.1} parent=1 // pred_region
      _
    $region13: #{autoencoder_forward.1} parent=1 // pred_fallthru
      _
    // Predicated region
    $region14: #{autoencoder_forward.1} parent=1 // pred_check
      _
    $region15: #{autoencoder_forward.1} parent=1 // pred_check_branch
      %40 = sbr.rel (0) target = $region17
    $region16: #{autoencoder_forward.1} parent=1 // pred_region
      %s42 = ssub.s32 512, 512
      %43 = vsyncadd [#allocation5], %s42
      %s44 = sshll.u32 [#allocation6], 4
      %s45 = int_to_ptr.vmem [resolvable:$true] %s44
      %50 = dma.hbm_to_vmem [thread:$0]  %s3, 512, %s45, [#allocation5], 128, 128, 8
    $region17: #{autoencoder_forward.1} parent=1 // pred_fallthru
      _
    // Predicated region
    $region18: #{autoencoder_forward.1} parent=1 // pred_check
      _
    $region19: #{autoencoder_forward.1} parent=1 // pred_check_branch
      %52 = sbr.rel (0) target = $region21
    $region20: #{autoencoder_forward.1} parent=1 // pred_region
      _
    $region21: #{autoencoder_forward.1} parent=1 // pred_fallthru
      _
    // Predicated region
    $region22: #{autoencoder_forward.1} parent=1 // pred_check
      _
    $region23: #{autoencoder_forward.1} parent=1 // pred_check_branch
      %54 = sbr.rel (0) target = $region25
    $region24: #{autoencoder_forward.1} parent=1 // pred_region
      %s56 = ssub.s32 512, 512
      %57 = vsyncadd [#allocation8], %s56
      %s58 = sshll.u32 [#allocation7], 4
      %s59 = int_to_ptr.vmem [resolvable:$true] %s58
      %64 = dma.hbm_to_vmem [thread:$0]  %s5, 512, %s59, [#allocation8], 128, 128, 8
    $region25: #{autoencoder_forward.1} parent=1 // pred_fallthru
      _
    // Predicated region
    $region26: #{autoencoder_forward.1} parent=1 // pred_check
      _
    $region27: #{autoencoder_forward.1} parent=1 // pred_check_branch
      %66 = sbr.rel (0) target = $region29
    $region28: #{autoencoder_forward.1} parent=1 // pred_region
      _
    $region29: #{autoencoder_forward.1} parent=1 // pred_fallthru
      _
    // Predicated region
    $region30: #{autoencoder_forward.1} parent=1 // pred_check
      _
    $region31: #{autoencoder_forward.1} parent=1 // pred_check_branch
      %68 = sbr.rel (0) target = $region33
    $region32: #{autoencoder_forward.1} parent=1 // pred_region
      %69 = dma.done [#allocation3], 128
    $region33: #{autoencoder_forward.1} parent=1 // pred_fallthru
      _
    // Predicated region
    $region34: #{autoencoder_forward.1} parent=1 // pred_check
      _
    $region35: #{autoencoder_forward.1} parent=1 // pred_check_branch
      %71 = sbr.rel (0) target = $region37
    $region36: #{autoencoder_forward.1} parent=1 // pred_region
      %72 = dma.done [#allocation5], 256
    $region37: #{autoencoder_forward.1} parent=1 // pred_fallthru
      _
    // Predicated region
    $region38: #{autoencoder_forward.1} parent=1 // pred_check
      _
    $region39: #{autoencoder_forward.1} parent=1 // pred_check_branch
      %74 = sbr.rel (0) target = $region41
    $region40: #{autoencoder_forward.1} parent=1 // pred_region
      %75 = dma.done [#allocation5], 512
    $region41: #{autoencoder_forward.1} parent=1 // pred_fallthru
      _
    // Predicated region
    $region42: #{autoencoder_forward.1} parent=1 // pred_check
      _
    $region43: #{autoencoder_forward.1} parent=1 // pred_check_branch
      %77 = sbr.rel (0) target = $region45
    $region44: #{autoencoder_forward.1} parent=1 // pred_region
      %78 = dma.done [#allocation8], 512
    $region45: #{autoencoder_forward.1} parent=1 // pred_fallthru
      _
    %v79 = vld [vmem:[#allocation2] sm:$0xff]
    %v80 = vld [vmem:[#allocation4] sm:$0xff]
    %v81 = vld [vmem:[#allocation4 + $0x8] sm:$0xff]
    %v82 = vld [vmem:[%s2] sm:$0x1]
    %v84 = vlaneseq
    %v85 = vshrl.u32 %v84, 7
    %v86 = vsub.s32 0, %v85
    %v87 = vrot.slane %v82, %v86
    %vm89 = vcmask 130048
    %v91 = vsel %vm89, %v79, 0
    %93 = vmatprep.subr.mxu0 0.0
    %94 = vmatpush1.msra.mxu0 %v80
    %95 = vmatprep.subr.mxu0 0.0
    %96 = vmatpush1.msra.mxu0 %v81
    %97 = vmatprep.subr.mxu0 0.0
    %98 = vmatpush1.msra.mxu0 0.0
    %99 = vmatprep.subr.mxu0 0.0
    %100 = vmatpush1.msra.mxu0 0.0
    %101 = vmatprep.subr.mxu0 0.0
    %102 = vmatpush1.msra.mxu0 0.0
    %103 = vmatprep.subr.mxu0 0.0
    %104 = vmatpush1.msra.mxu0 0.0
    %105 = vmatprep.subr.mxu0 0.0
    %106 = vmatpush1.msra.mxu0 0.0
    %107 = vmatprep.subr.mxu0 0.0
    %108 = vmatpush1.msra.mxu0 0.0
    %109 = vmatprep.subr.mxu0 0.0
    %110 = vmatpush1.msra.mxu0 0.0
    %111 = vmatprep.subr.mxu0 0.0
    %112 = vmatpush1.msra.mxu0 0.0
    %113 = vmatprep.subr.mxu0 0.0
    %114 = vmatpush1.msra.mxu0 0.0
    %115 = vmatprep.subr.mxu0 0.0
    %116 = vmatpush1.msra.mxu0 0.0
    %117 = vmatprep.subr.mxu0 0.0
    %118 = vmatpush1.msra.mxu0 0.0
    %119 = vmatprep.subr.mxu0 0.0
    %120 = vmatpush1.msra.mxu0 0.0
    %121 = vmatprep.subr.mxu0 0.0
    %122 = vmatpush1.msra.mxu0 0.0
    %123 = vmatprep.subr.mxu0 0.0
    %124 = vmatpush1.msra.mxu0 0.0
    %125 = vmatprep.subr.mxu0 0.0
    %126 = vmatpush1.msra.mxu0 0.0
    %127 = vmatprep.subr.mxu0 0.0
    %128 = vmatpush1.msra.mxu0 0.0
    %129 = vmatprep.subr.mxu0 0.0
    %130 = vmatpush1.msra.mxu0 0.0
    %131 = vmatprep.subr.mxu0 0.0
    %132 = vmatpush1.msra.mxu0 0.0
    %133 = vmatprep.subr.mxu0 0.0
    %134 = vmatpush1.msra.mxu0 0.0
    %135 = vmatprep.subr.mxu0 0.0
    %136 = vmatpush1.msra.mxu0 0.0
    %137 = vmatprep.subr.mxu0 0.0
    %138 = vmatpush1.msra.mxu0 0.0
    %139 = vmatprep.subr.mxu0 0.0
    %140 = vmatpush1.msra.mxu0 0.0
    %141 = vmatprep.subr.mxu0 0.0
    %142 = vmatpush1.msra.mxu0 0.0
    %143 = vmatprep.subr.mxu0 0.0
    %144 = vmatpush1.msra.mxu0 0.0
    %145 = vmatprep.subr.mxu0 0.0
    %146 = vmatpush1.msra.mxu0 0.0
    %147 = vmatprep.subr.mxu0 0.0
    %148 = vmatpush1.msra.mxu0 0.0
    %149 = vmatprep.subr.mxu0 0.0
    %150 = vmatpush1.msra.mxu0 0.0
    %151 = vmatprep.subr.mxu0 0.0
    %152 = vmatpush1.msra.mxu0 0.0
    %153 = vmatprep.subr.mxu0 0.0
    %154 = vmatpush1.msra.mxu0 0.0
    %155 = vmatprep.subr.mxu0 0.0
    %156 = vmatpush1.msra.mxu0 0.0
    %157 = vmatprep.mubr.f32.mxu0 0.0
    %158 = vmatmul.mubr.f32.gmra.mrb[0].mxu0 %v91
    %v159 = vpop.f32.mrb[0].mxu0
    %v160 = vadd.f32 %v87, %v159
    %v161 = vpop.f32.mrb[0].mxu0
    %162 = vdwg.mxu0
    %v163 = vmax.f32 %v160, 0.0
    %v164 = vld [vmem:[#allocation6] sm:$0xff]
    %v165 = vld [vmem:[#allocation6 + $0x8] sm:$0xff]
    %v166 = vld [vmem:[#allocation6 + $0x10] sm:$0xff]
    %v167 = vld [vmem:[#allocation6 + $0x18] sm:$0xff]
    %v168 = vld [vmem:[%s4] sm:$0x1]
    %v170 = vlaneseq
    %v171 = vshrl.u32 %v170, 7
    %v172 = vsub.s32 0, %v171
    %v173 = vrot.slane %v168, %v172
    %vm175 = vcmask 261120
    %v177 = vsel %vm175, %v163, 0
    %179 = vmatprep.subr.mxu0 0.0
    %180 = vmatpush1.msra.mxu0 %v164
    %181 = vmatprep.subr.mxu0 0.0
    %182 = vmatpush1.msra.mxu0 %v165
    %183 = vmatprep.subr.mxu0 0.0
    %184 = vmatpush1.msra.mxu0 %v166
    %185 = vmatprep.subr.mxu0 0.0
    %186 = vmatpush1.msra.mxu0 %v167
    %187 = vmatprep.subr.mxu0 0.0
    %188 = vmatpush1.msra.mxu0 0.0
    %189 = vmatprep.subr.mxu0 0.0
    %190 = vmatpush1.msra.mxu0 0.0
    %191 = vmatprep.subr.mxu0 0.0
    %192 = vmatpush1.msra.mxu0 0.0
    %193 = vmatprep.subr.mxu0 0.0
    %194 = vmatpush1.msra.mxu0 0.0
    %195 = vmatprep.subr.mxu0 0.0
    %196 = vmatpush1.msra.mxu0 0.0
    %197 = vmatprep.subr.mxu0 0.0
    %198 = vmatpush1.msra.mxu0 0.0
    %199 = vmatprep.subr.mxu0 0.0
    %200 = vmatpush1.msra.mxu0 0.0
    %201 = vmatprep.subr.mxu0 0.0
    %202 = vmatpush1.msra.mxu0 0.0
    %203 = vmatprep.subr.mxu0 0.0
    %204 = vmatpush1.msra.mxu0 0.0
    %205 = vmatprep.subr.mxu0 0.0
    %206 = vmatpush1.msra.mxu0 0.0
    %207 = vmatprep.subr.mxu0 0.0
    %208 = vmatpush1.msra.mxu0 0.0
    %209 = vmatprep.subr.mxu0 0.0
    %210 = vmatpush1.msra.mxu0 0.0
    %211 = vmatprep.subr.mxu0 0.0
    %212 = vmatpush1.msra.mxu0 0.0
    %213 = vmatprep.subr.mxu0 0.0
    %214 = vmatpush1.msra.mxu0 0.0
    %215 = vmatprep.subr.mxu0 0.0
    %216 = vmatpush1.msra.mxu0 0.0
    %217 = vmatprep.subr.mxu0 0.0
    %218 = vmatpush1.msra.mxu0 0.0
    %219 = vmatprep.subr.mxu0 0.0
    %220 = vmatpush1.msra.mxu0 0.0
    %221 = vmatprep.subr.mxu0 0.0
    %222 = vmatpush1.msra.mxu0 0.0
    %223 = vmatprep.subr.mxu0 0.0
    %224 = vmatpush1.msra.mxu0 0.0
    %225 = vmatprep.subr.mxu0 0.0
    %226 = vmatpush1.msra.mxu0 0.0
    %227 = vmatprep.subr.mxu0 0.0
    %228 = vmatpush1.msra.mxu0 0.0
    %229 = vmatprep.subr.mxu0 0.0
    %230 = vmatpush1.msra.mxu0 0.0
    %231 = vmatprep.subr.mxu0 0.0
    %232 = vmatpush1.msra.mxu0 0.0
    %233 = vmatprep.subr.mxu0 0.0
    %234 = vmatpush1.msra.mxu0 0.0
    %235 = vmatprep.subr.mxu0 0.0
    %236 = vmatpush1.msra.mxu0 0.0
    %237 = vmatprep.subr.mxu0 0.0
    %238 = vmatpush1.msra.mxu0 0.0
    %239 = vmatprep.subr.mxu0 0.0
    %240 = vmatpush1.msra.mxu0 0.0
    %241 = vmatprep.subr.mxu0 0.0
    %242 = vmatpush1.msra.mxu0 0.0
    %243 = vmatprep.mubr.f32.mxu0 0.0
    %244 = vmatmul.mubr.f32.gmra.mrb[0].mxu0 %v177
    %v245 = vpop.f32.mrb[0].mxu0
    %v246 = vadd.f32 %v173, %v245
    %v247 = vpop.f32.mrb[0].mxu0
    %248 = vdwg.mxu0
    %v249 = vmax.f32 %v246, 0.0
    %v250 = vld [vmem:[#allocation7] sm:$0xff]
    %v251 = vld [vmem:[#allocation7 + $0x8] sm:$0xff]
    %v252 = vld [vmem:[#allocation7 + $0x10] sm:$0xff]
    %v253 = vld [vmem:[#allocation7 + $0x18] sm:$0xff]
    %v254 = vld [vmem:[%s6] sm:$0x1]
    %v256 = vlaneseq
    %v257 = vshrl.u32 %v256, 7
    %v258 = vsub.s32 0, %v257
    %v259 = vrot.slane %v254, %v258
    %v262 = vsel %vm175, %v249, 0
    %264 = vmatprep.subr.mxu0 0.0
    %265 = vmatpush1.msra.mxu0 %v250
    %266 = vmatprep.subr.mxu0 0.0
    %267 = vmatpush1.msra.mxu0 %v251
    %268 = vmatprep.subr.mxu0 0.0
    %269 = vmatpush1.msra.mxu0 %v252
    %270 = vmatprep.subr.mxu0 0.0
    %271 = vmatpush1.msra.mxu0 %v253
    %272 = vmatprep.subr.mxu0 0.0
    %273 = vmatpush1.msra.mxu0 0.0
    %274 = vmatprep.subr.mxu0 0.0
    %275 = vmatpush1.msra.mxu0 0.0
    %276 = vmatprep.subr.mxu0 0.0
    %277 = vmatpush1.msra.mxu0 0.0
    %278 = vmatprep.subr.mxu0 0.0
    %279 = vmatpush1.msra.mxu0 0.0
    %280 = vmatprep.subr.mxu0 0.0
    %281 = vmatpush1.msra.mxu0 0.0
    %282 = vmatprep.subr.mxu0 0.0
    %283 = vmatpush1.msra.mxu0 0.0
    %284 = vmatprep.subr.mxu0 0.0
    %285 = vmatpush1.msra.mxu0 0.0
    %286 = vmatprep.subr.mxu0 0.0
    %287 = vmatpush1.msra.mxu0 0.0
    %288 = vmatprep.subr.mxu0 0.0
    %289 = vmatpush1.msra.mxu0 0.0
    %290 = vmatprep.subr.mxu0 0.0
    %291 = vmatpush1.msra.mxu0 0.0
    %292 = vmatprep.subr.mxu0 0.0
    %293 = vmatpush1.msra.mxu0 0.0
    %294 = vmatprep.subr.mxu0 0.0
    %295 = vmatpush1.msra.mxu0 0.0
    %296 = vmatprep.subr.mxu0 0.0
    %297 = vmatpush1.msra.mxu0 0.0
    %298 = vmatprep.subr.mxu0 0.0
    %299 = vmatpush1.msra.mxu0 0.0
    %300 = vmatprep.subr.mxu0 0.0
    %301 = vmatpush1.msra.mxu0 0.0
    %302 = vmatprep.subr.mxu0 0.0
    %303 = vmatpush1.msra.mxu0 0.0
    %304 = vmatprep.subr.mxu0 0.0
    %305 = vmatpush1.msra.mxu0 0.0
    %306 = vmatprep.subr.mxu0 0.0
    %307 = vmatpush1.msra.mxu0 0.0
    %308 = vmatprep.subr.mxu0 0.0
    %309 = vmatpush1.msra.mxu0 0.0
    %310 = vmatprep.subr.mxu0 0.0
    %311 = vmatpush1.msra.mxu0 0.0
    %312 = vmatprep.subr.mxu0 0.0
    %313 = vmatpush1.msra.mxu0 0.0
    %314 = vmatprep.subr.mxu0 0.0
    %315 = vmatpush1.msra.mxu0 0.0
    %316 = vmatprep.subr.mxu0 0.0
    %317 = vmatpush1.msra.mxu0 0.0
    %318 = vmatprep.subr.mxu0 0.0
    %319 = vmatpush1.msra.mxu0 0.0
    %320 = vmatprep.subr.mxu0 0.0
    %321 = vmatpush1.msra.mxu0 0.0
    %322 = vmatprep.subr.mxu0 0.0
    %323 = vmatpush1.msra.mxu0 0.0
    %324 = vmatprep.subr.mxu0 0.0
    %325 = vmatpush1.msra.mxu0 0.0
    %326 = vmatprep.subr.mxu0 0.0
    %327 = vmatpush1.msra.mxu0 0.0
    %328 = vmatprep.mubr.f32.mxu0 0.0
    %329 = vmatmul.mubr.f32.gmra.mrb[0].mxu0 %v262
    %v330 = vpop.f32.mrb[0].mxu0
    %v331 = vadd.f32 %v259, %v330
    %v332 = vpop.f32.mrb[0].mxu0
    %333 = vdwg.mxu0
    %v334 = vlaneseq
    %v335 = vand.u32 %v334, 127
    %vm336 = vcmp.lt.s32.totalorder %v335, 16
    %v337 = vmax.f32 %v331, 0.0
    %v338 = vsel %vm336, %v337, %v331
    %339 = vst [vmem:[%s7] sm:$0xff] %v338
    // Predicated region
    $region46: #{autoencoder_forward.1} parent=1 // pred_check
      _
    $region47: #{autoencoder_forward.1} parent=1 // pred_check_branch
      %341 = sbr.rel (0) target = $region49
    $region48: #{autoencoder_forward.1} parent=1 // pred_region
      _
    $region49: #{autoencoder_forward.1} parent=1 // pred_fallthru
      _
    // Predicated region
    $region50: #{autoencoder_forward.1} parent=1 // pred_check
      _
    $region51: #{autoencoder_forward.1} parent=1 // pred_check_branch
      %343 = sbr.rel (0) target = $region53
    $region52: #{autoencoder_forward.1} parent=1 // pred_region
      _
    $region53: #{autoencoder_forward.1} parent=1 // pred_fallthru
      _
    %344 = vsyncpa [#allocation3], 1
    %345 = vsyncpa [#allocation5], 1
    %346 = vsyncpa [#allocation8], 1

</llo_original>
